<compile_context>
chip_gen: v5e
topology: v5e:2x2
jax: 0.10.0
libtpu: 0.0.40
codegen_flags: <defaults>
</compile_context>

<pallas_src>
import math
import numpy as np
import jax
import jax.numpy as jnp
from jax.experimental import pallas as pl
from jax.experimental.pallas import tpu as pltpu


def _round_up(n, m):
    return ((n + m - 1) // m) * m


def _pick_q_tile(Lp):
    # Largest multiple of 128 that divides Lp and is <= 512.
    for t in (512, 384, 256, 128):
        if t <= Lp and Lp % t == 0:
            return t
    return Lp


def make_attmodule_kernel(C, Cq, Cv, L, Lp, TQ, dilation, alpha, sub, mx_dtype):
    d = dilation
    inv_L = 1.0 / L
    inv_sqrt_cq = 1.0 / math.sqrt(Cq)
    NEG = -1e30

    def tile_cols(v):
        # Slice the current q-tile's columns out of a full-(., Lp) value.
        if TQ == Lp:
            return v
        # TODO(synk): for very long L, restructure as a flash-style online
        # softmax over k tiles as well, instead of recomputing the full-L
        # projections per q tile.
        q0 = pl.multiple_of(pl.program_id(1) * TQ, 128)
        return jax.lax.dynamic_slice_in_dim(v, q0, TQ, axis=1)

    def kernel(x_ref, f_ref, pm_ref, ffw_ref, qkw_ref, vw_ref, cow_ref,
               c11w_ref, bias_ref, out_ref):
        x = x_ref[...]            # (C, Lp), zero-padded past L
        f = f_ref[...]            # (C, Lp)
        pm = pm_ref[...]          # (1, Lp), zero past L

        col = jax.lax.broadcasted_iota(jnp.int32, (1, Lp), 1)
        lkeep = (col >= d).astype(jnp.float32)        # kill left-tap wrap
        rkeep = (col < Lp - d).astype(jnp.float32)    # kill right-tap wrap
        vmask = (col < L).astype(jnp.float32)         # real (unpadded) columns

        # packed biases (segments start on sublane-aligned offsets)
        ffb = bias_ref[0 * sub:0 * sub + C, :]
        qkb = bias_ref[1 * sub:1 * sub + 2 * Cq, :]
        vb = bias_ref[2 * sub:2 * sub + Cv, :]
        cob = bias_ref[3 * sub:3 * sub + C, :]
        c11b = bias_ref[4 * sub:4 * sub + C, :]

        def mm(a, b):
            return jnp.dot(a.astype(mx_dtype), b.astype(mx_dtype),
                           preferred_element_type=jnp.float32)

        # ---- ConvFeedForward: dilated conv (k=3, padding=d, dilation=d) + ReLU.
        # Shifted taps via XLU roll; stacked on the sublane axis so the conv is
        # one matmul with contraction depth 3C instead of three K=C matmuls.
        x_m = pltpu.roll(x, shift=d, axis=1) * lkeep
        x_p = pltpu.roll(x, shift=Lp - d, axis=1) * rkeep
        taps = jnp.concatenate([x_m, x, x_p], axis=0)               # (3C, Lp)
        ff_out = jnp.maximum(mm(ffw_ref[...], taps) + ffb, 0.0)     # (C, Lp)

        # ---- InstanceNorm1d (affine=False, biased var, eps=1e-5) over real L
        # (two-pass, centred variance for stability).
        mean = jnp.sum(ff_out * vmask, axis=1, keepdims=True) * inv_L
        cent = (ff_out - mean) * vmask
        var = jnp.sum(cent * cent, axis=1, keepdims=True) * inv_L
        normed = (ff_out - mean) * jax.lax.rsqrt(var + 1e-5)

        # ---- AttLayer (normal_att, decoder): fused q/k projection, v from f.
        qk = mm(qkw_ref[...], normed) + qkb                         # (2Cq, Lp)
        v = mm(vw_ref[...], f) + vb                                 # (Cv, Lp)

        q_t = tile_cols(qk[:Cq, :])                                 # (Cq, TQ)
        k = qk[Cq:, :]                                              # (Cq, Lp)

        # scores[tq, tk] = sum_c q[c, tq] * k[c, tk]   (no explicit q.T)
        scores = jax.lax.dot_general(
            q_t.astype(mx_dtype), k.astype(mx_dtype),
            dimension_numbers=(((0,), (0,)), ((), ())),
            preferred_element_type=jnp.float32) * inv_sqrt_cq       # (TQ, Lp)
        # additive key mask; padded lane columns -> -inf (exp -> exactly 0)
        key_bias = jnp.where(col < L, jnp.log(pm + 1e-6), NEG)
        scores = scores + key_bias
        scores = scores - jnp.max(scores, axis=-1, keepdims=True)
        e = jnp.exp(scores)
        denom = jnp.sum(e, axis=-1, keepdims=True)
        inv = pl.reciprocal(denom, approx=True)                     # EUP slot
        inv = inv * (2.0 - denom * inv)                             # Newton step
        att = (e * inv) * pm                                        # (TQ, Lp)

        # att_out[cv, tq] = sum_tk v[cv, tk] * att[tq, tk]  (no explicit att.T)
        att_out = jax.lax.dot_general(
            v.astype(mx_dtype), att.astype(mx_dtype),
            dimension_numbers=(((1,), (1,)), ((), ())),
            preferred_element_type=jnp.float32)                     # (Cv, TQ)

        pm_t = tile_cols(pm)
        co = (mm(cow_ref[...], jnp.maximum(att_out, 0.0)) + cob) * pm_t

        # ---- residual mix, conv_1x1, dropout(identity), final residual + mask.
        out2 = alpha * co + tile_cols(ff_out)
        c11 = mm(c11w_ref[...], out2) + c11b
        # TODO(synk): nn.Dropout() treated as identity (inference mode).
        out_ref[...] = (tile_cols(x) + c11) * pm_t

    return kernel


def attmodule_forward(x, f, mask, params, *, dilation, alpha,
                      matmul_dtype=jnp.float32):
    """matmul_dtype: jnp.float32 (exact; used for the correctness check) or
    jnp.bfloat16 (recommended MXU operand dtype on v6e/v7x; accumulation and
    all VPU math stay in f32)."""
    B, C, L = x.shape
    Cq = params["qw"].shape[0]
    Cv = params["vw"].shape[0]
    d = dilation

    Lp = _round_up(L, 128)          # lane-dense length
    TQ = _pick_q_tile(Lp)
    NQ = Lp // TQ
    sub = _round_up(max(C, 2 * Cq, Cv), 8)

    padL = ((0, 0), (0, 0), (0, Lp - L))
    x_p = jnp.pad(x, padL)
    f_p = jnp.pad(f, padL)
    pm_p = jnp.pad(mask[:, 0:1, :], padL)        # (B, 1, Lp), zeros past L

    # ff-conv weight concatenated to (C, 3C): one K=3C matmul per grid step.
    ffw_cat = jnp.concatenate(
        [params["ffw"][:, :, 0], params["ffw"][:, :, 1], params["ffw"][:, :, 2]],
        axis=1)
    # fused q/k projection weight
    qkw = jnp.concatenate([params["qw"], params["kw"]], axis=0)

    # pack the small biases into one sublane-aligned column vector (one DMA).
    qkb = jnp.concatenate([params["qb"], params["kb"]], axis=0)
    pieces = [params["ffb"], qkb, params["vb"], params["cob"], params["c11b"]]
    bias_pack = jnp.zeros((5 * sub, 1), jnp.float32)
    for i, p_ in enumerate(pieces):
        bias_pack = bias_pack.at[i * sub:i * sub + p_.shape[0], :].set(p_)

    kernel = make_attmodule_kernel(C, Cq, Cv, L, Lp, TQ, d, alpha, sub,
                                   matmul_dtype)

    full = lambda b, qi: (b, 0, 0)
    w0 = lambda b, qi: (0, 0)

    # rough per-step working-set estimate (f32) to raise the scoped VMEM limit
    # at realistic L (v5e's default scoped limit is only 16 MiB).
    work = 4 * Lp * (8 * C + 6 * Cq + 2 * Cv) + 4 * TQ * Lp * 3
    vmem_limit = int(min(96 * 2 ** 20, max(32 * 2 ** 20, 4 * work)))

    out_p = pl.pallas_call(
        kernel,
        out_shape=jax.ShapeDtypeStruct((B, C, Lp), jnp.float32),
        grid=(B, NQ),
        in_specs=[
            pl.BlockSpec((pl.Squeezed(), C, Lp), full),       # x
            pl.BlockSpec((pl.Squeezed(), C, Lp), full),       # f
            pl.BlockSpec((pl.Squeezed(), 1, Lp), full),       # padding mask
            pl.BlockSpec((C, 3 * C), w0),                     # ffw (concat taps)
            pl.BlockSpec((2 * Cq, C), w0),                    # fused q/k weight
            pl.BlockSpec((Cv, C), w0),                        # value weight
            pl.BlockSpec((C, Cv), w0),                        # conv_out weight
            pl.BlockSpec((C, C), w0),                         # conv_1x1 weight
            pl.BlockSpec((5 * sub, 1), w0),                   # packed biases
        ],
        out_specs=pl.BlockSpec((pl.Squeezed(), C, TQ), lambda b, qi: (b, 0, qi)),
        compiler_params=pltpu.CompilerParams(
            dimension_semantics=("parallel", "parallel"),
            vmem_limit_bytes=vmem_limit),
    )(x_p, f_p, pm_p, ffw_cat, qkw, params["vw"], params["cow"],
      params["c11w"], bias_pack)

    return out_p[:, :, :L]


def reference_forward(x, f, mask, p, *, dilation, alpha):
    """Pure-JAX reference mirroring the PyTorch semantics (for verification)."""
    B, C, L = x.shape
    d = dilation
    Cq = p["qw"].shape[0]
    pm = mask[:, 0:1, :]

    xp = jnp.pad(x, ((0, 0), (0, 0), (d, d)))
    conv = (jnp.einsum("oi,bil->bol", p["ffw"][:, :, 0], xp[:, :, 0:L])
            + jnp.einsum("oi,bil->bol", p["ffw"][:, :, 1], xp[:, :, d:d + L])
            + jnp.einsum("oi,bil->bol", p["ffw"][:, :, 2], xp[:, :, 2 * d:2 * d + L])
            + p["ffb"][None])
    ff_out = jnp.maximum(conv, 0.0)

    mean = jnp.mean(ff_out, axis=2, keepdims=True)
    var = jnp.mean((ff_out - mean) ** 2, axis=2, keepdims=True)
    normed = (ff_out - mean) / jnp.sqrt(var + 1e-5)

    q = jnp.einsum("oi,bil->bol", p["qw"], normed) + p["qb"][None]
    k = jnp.einsum("oi,bil->bol", p["kw"], normed) + p["kb"][None]
    v = jnp.einsum("oi,bil->bol", p["vw"], f) + p["vb"][None]

    energy = jnp.einsum("bcq,bck->bqk", q, k) / math.sqrt(Cq)
    att = energy + jnp.log(pm + 1e-6)
    att = jax.nn.softmax(att, axis=-1)
    att = att * pm
    att_out = jnp.einsum("bck,bqk->bcq", v, att)

    co = jnp.einsum("oi,bil->bol", p["cow"], jnp.maximum(att_out, 0.0)) + p["cob"][None]
    co = co * pm

    out2 = alpha * co + ff_out
    c11 = jnp.einsum("oi,bil->bol", p["c11w"], out2) + p["c11b"][None]
    return (x + c11) * pm


if __name__ == "__main__":
    # Small shapes consistent with AttModule(dilation, in_channels, out_channels, r1, r2, ...)
    B, C, L = 2, 8, 16
    r1, r2 = 2, 2
    dilation = 1
    alpha = 0.7
    Cq, Cv = C // r1, C // r2

    key = jax.random.PRNGKey(0)
    ks = jax.random.split(key, 14)

    params = {
        "ffw": 0.1 * jax.random.normal(ks[0], (C, C, 3), jnp.float32),
        "ffb": 0.1 * jax.random.normal(ks[1], (C, 1), jnp.float32),
        "qw": 0.1 * jax.random.normal(ks[2], (Cq, C), jnp.float32),
        "qb": 0.1 * jax.random.normal(ks[3], (Cq, 1), jnp.float32),
        "kw": 0.1 * jax.random.normal(ks[4], (Cq, C), jnp.float32),
        "kb": 0.1 * jax.random.normal(ks[5], (Cq, 1), jnp.float32),
        "vw": 0.1 * jax.random.normal(ks[6], (Cv, C), jnp.float32),
        "vb": 0.1 * jax.random.normal(ks[7], (Cv, 1), jnp.float32),
        "cow": 0.1 * jax.random.normal(ks[8], (C, Cv), jnp.float32),
        "cob": 0.1 * jax.random.normal(ks[9], (C, 1), jnp.float32),
        "c11w": 0.1 * jax.random.normal(ks[10], (C, C), jnp.float32),
        "c11b": 0.1 * jax.random.normal(ks[11], (C, 1), jnp.float32),
    }

    x = jax.random.normal(ks[12], (B, C, L), jnp.float32)
    f = jax.random.normal(ks[13], (B, C, L), jnp.float32)

    # padding mask: sequence lengths [16, 12]
    lens = jnp.array([16, 12])
    pos = jnp.arange(L)[None, None, :]
    mask = (pos < lens[:, None, None]).astype(jnp.float32) * jnp.ones((B, C, L), jnp.float32)

    out = attmodule_forward(x, f, mask, params, dilation=dilation, alpha=alpha)
    out = jax.block_until_ready(out)

    ref = reference_forward(x, f, mask, params, dilation=dilation, alpha=alpha)
    np.testing.assert_allclose(np.asarray(out), np.asarray(ref), rtol=1e-4, atol=1e-4)

    print("KERNEL_OK")
</pallas_src>

<mosaic_0001>
module attributes {stable_mosaic.version = 11 : i64} {
  func.func @kernel(%arg0: i32, %arg1: i32, %arg2: memref<1x8x128xf32, #tpu.memory_space<vmem>>, %arg3: memref<1x8x128xf32, #tpu.memory_space<vmem>>, %arg4: memref<1x1x128xf32, #tpu.memory_space<vmem>>, %arg5: memref<8x24xf32, #tpu.memory_space<vmem>>, %arg6: memref<8x8xf32, #tpu.memory_space<vmem>>, %arg7: memref<4x8xf32, #tpu.memory_space<vmem>>, %arg8: memref<8x4xf32, #tpu.memory_space<vmem>>, %arg9: memref<8x8xf32, #tpu.memory_space<vmem>>, %arg10: memref<40x1xf32, #tpu.memory_space<vmem>>, %arg11: memref<1x8x128xf32, #tpu.memory_space<vmem>>) attributes {dimension_semantics = [#tpu.dimension_semantics<parallel>, #tpu.dimension_semantics<parallel>], iteration_bounds = array<i64: 2, 1>, scalar_prefetch = 0 : i64, scratch_operands = 0 : i64, tpu.core_type = #tpu.core_type<tc>, window_params = [{transform_indices = @transform_0, window_bounds = array<i64: 1, 8, 128>}, {transform_indices = @transform_1, window_bounds = array<i64: 1, 8, 128>}, {transform_indices = @transform_2, window_bounds = array<i64: 1, 1, 128>}, {pipeline_mode = #tpu.pipeline_mode<synchronous>, transform_indices = @transform_3, window_bounds = array<i64: 8, 24>}, {pipeline_mode = #tpu.pipeline_mode<synchronous>, transform_indices = @transform_4, window_bounds = array<i64: 8, 8>}, {pipeline_mode = #tpu.pipeline_mode<synchronous>, transform_indices = @transform_5, window_bounds = array<i64: 4, 8>}, {pipeline_mode = #tpu.pipeline_mode<synchronous>, transform_indices = @transform_6, window_bounds = array<i64: 8, 4>}, {pipeline_mode = #tpu.pipeline_mode<synchronous>, transform_indices = @transform_7, window_bounds = array<i64: 8, 8>}, {pipeline_mode = #tpu.pipeline_mode<synchronous>, transform_indices = @transform_8, window_bounds = array<i64: 40, 1>}, {transform_indices = @transform_9, window_bounds = array<i64: 1, 8, 128>}]} {
    %c0 = arith.constant 0 : index
    %c0_0 = arith.constant 0 : index
    %c0_1 = arith.constant 0 : index
    %0 = vector.load %arg2[%c0, %c0_0, %c0_1] : memref<1x8x128xf32, #tpu.memory_space<vmem>>, vector<1x8x128xf32>
    %1 = vector.shape_cast %0 : vector<1x8x128xf32> to vector<8x128xf32>
    %c0_2 = arith.constant 0 : index
    %c0_3 = arith.constant 0 : index
    %c0_4 = arith.constant 0 : index
    %2 = vector.load %arg3[%c0_2, %c0_3, %c0_4] : memref<1x8x128xf32, #tpu.memory_space<vmem>>, vector<1x8x128xf32>
    %3 = vector.shape_cast %2 : vector<1x8x128xf32> to vector<8x128xf32>
    %c0_5 = arith.constant 0 : index
    %c0_6 = arith.constant 0 : index
    %c0_7 = arith.constant 0 : index
    %4 = vector.load %arg4[%c0_5, %c0_6, %c0_7] : memref<1x1x128xf32, #tpu.memory_space<vmem>>, vector<1x1x128xf32>
    %5 = vector.shape_cast %4 : vector<1x1x128xf32> to vector<1x128xf32>
    %6 = tpu.iota {dimensions = array<i32: 1>} : vector<1x128xi32>
    %c1_i32 = arith.constant 1 : i32
    %7 = vector.broadcast %c1_i32 : i32 to vector<1x128xi32>
    %8 = arith.cmpi sge, %6, %7 : vector<1x128xi32>
    %9 = arith.extui %8 : vector<1x128xi1> to vector<1x128xi32>
    %10 = arith.sitofp %9 : vector<1x128xi32> to vector<1x128xf32>
    %c127_i32 = arith.constant 127 : i32
    %11 = vector.broadcast %c127_i32 : i32 to vector<1x128xi32>
    %12 = arith.cmpi slt, %6, %11 : vector<1x128xi32>
    %13 = arith.extui %12 : vector<1x128xi1> to vector<1x128xi32>
    %14 = arith.sitofp %13 : vector<1x128xi32> to vector<1x128xf32>
    %c16_i32 = arith.constant 16 : i32
    %15 = vector.broadcast %c16_i32 : i32 to vector<1x128xi32>
    %16 = arith.cmpi slt, %6, %15 : vector<1x128xi32>
    %17 = arith.extui %16 : vector<1x128xi1> to vector<1x128xi32>
    %18 = arith.sitofp %17 : vector<1x128xi32> to vector<1x128xf32>
    %c0_8 = arith.constant 0 : index
    %c0_9 = arith.constant 0 : index
    %19 = vector.load %arg10[%c0_8, %c0_9] : memref<40x1xf32, #tpu.memory_space<vmem>>, vector<8x1xf32>
    %c8 = arith.constant 8 : index
    %c0_10 = arith.constant 0 : index
    %20 = vector.load %arg10[%c8, %c0_10] : memref<40x1xf32, #tpu.memory_space<vmem>>, vector<8x1xf32>
    %c16 = arith.constant 16 : index
    %c0_11 = arith.constant 0 : index
    %21 = vector.load %arg10[%c16, %c0_11] : memref<40x1xf32, #tpu.memory_space<vmem>>, vector<4x1xf32>
    %c24 = arith.constant 24 : index
    %c0_12 = arith.constant 0 : index
    %22 = vector.load %arg10[%c24, %c0_12] : memref<40x1xf32, #tpu.memory_space<vmem>>, vector<8x1xf32>
    %c32 = arith.constant 32 : index
    %c0_13 = arith.constant 0 : index
    %23 = vector.load %arg10[%c32, %c0_13] : memref<40x1xf32, #tpu.memory_space<vmem>>, vector<8x1xf32>
    %c1_i32_14 = arith.constant 1 : i32
    %24 = tpu.dynamic_rotate %1 by %c1_i32_14 dim 1 : vector<8x128xf32>, i32 -> vector<8x128xf32>
    %25 = vector.broadcast %10 : vector<1x128xf32> to vector<8x128xf32>
    %26 = arith.mulf %24, %25 : vector<8x128xf32>
    %c127_i32_15 = arith.constant 127 : i32
    %27 = tpu.dynamic_rotate %1 by %c127_i32_15 dim 1 : vector<8x128xf32>, i32 -> vector<8x128xf32>
    %28 = vector.broadcast %14 : vector<1x128xf32> to vector<8x128xf32>
    %29 = arith.mulf %27, %28 : vector<8x128xf32>
    %30 = tpu.concatenate %26, %1, %29 in 0 : vector<8x128xf32>, vector<8x128xf32>, vector<8x128xf32> -> vector<24x128xf32>
    %c0_16 = arith.constant 0 : index
    %c0_17 = arith.constant 0 : index
    %31 = vector.load %arg5[%c0_16, %c0_17] : memref<8x24xf32, #tpu.memory_space<vmem>>, vector<8x24xf32>
    %cst = arith.constant dense<0.000000e+00> : vector<8x128xf32>
    %32 = tpu.matmul %31, %30, %cst {dimension_numbers = #tpu.dot_dimension_numbers<[1], [0], [0], [1], [0, 0, 1, 1], [], []>} : vector<8x24xf32>, vector<24x128xf32>, vector<8x128xf32> -> vector<8x128xf32>
    %33 = vector.broadcast %19 : vector<8x1xf32> to vector<8x128xf32>
    %34 = arith.addf %32, %33 : vector<8x128xf32>
    %cst_18 = arith.constant 0.000000e+00 : f32
    %35 = vector.broadcast %cst_18 : f32 to vector<8x128xf32>
    %36 = arith.maximumf %34, %35 : vector<8x128xf32>
    %37 = vector.broadcast %18 : vector<1x128xf32> to vector<8x128xf32>
    %38 = arith.mulf %36, %37 : vector<8x128xf32>
    %cst_19 = arith.constant dense<0.000000e+00> : vector<8xf32>
    %39 = vector.multi_reduction <add>, %38, %cst_19 [1] : vector<8x128xf32> to vector<8xf32>
    %40 = vector.shape_cast %39 : vector<8xf32> to vector<8x1xf32>
    %cst_20 = arith.constant 6.250000e-02 : f32
    %41 = vector.broadcast %cst_20 : f32 to vector<8x1xf32>
    %42 = arith.mulf %40, %41 : vector<8x1xf32>
    %43 = vector.broadcast %42 : vector<8x1xf32> to vector<8x128xf32>
    %44 = arith.subf %36, %43 : vector<8x128xf32>
    %45 = vector.broadcast %18 : vector<1x128xf32> to vector<8x128xf32>
    %46 = arith.mulf %44, %45 : vector<8x128xf32>
    %47 = arith.mulf %46, %46 : vector<8x128xf32>
    %cst_21 = arith.constant dense<0.000000e+00> : vector<8xf32>
    %48 = vector.multi_reduction <add>, %47, %cst_21 [1] : vector<8x128xf32> to vector<8xf32>
    %49 = vector.shape_cast %48 : vector<8xf32> to vector<8x1xf32>
    %cst_22 = arith.constant 6.250000e-02 : f32
    %50 = vector.broadcast %cst_22 : f32 to vector<8x1xf32>
    %51 = arith.mulf %49, %50 : vector<8x1xf32>
    %52 = vector.broadcast %42 : vector<8x1xf32> to vector<8x128xf32>
    %53 = arith.subf %36, %52 : vector<8x128xf32>
    %cst_23 = arith.constant 9.99999974E-6 : f32
    %54 = vector.broadcast %cst_23 : f32 to vector<8x1xf32>
    %55 = arith.addf %51, %54 : vector<8x1xf32>
    %56 = math.rsqrt %55 : vector<8x1xf32>
    %57 = vector.broadcast %56 : vector<8x1xf32> to vector<8x128xf32>
    %58 = arith.mulf %53, %57 : vector<8x128xf32>
    %c0_24 = arith.constant 0 : index
    %c0_25 = arith.constant 0 : index
    %59 = vector.load %arg6[%c0_24, %c0_25] : memref<8x8xf32, #tpu.memory_space<vmem>>, vector<8x8xf32>
    %cst_26 = arith.constant dense<0.000000e+00> : vector<8x128xf32>
    %60 = tpu.matmul %59, %58, %cst_26 {dimension_numbers = #tpu.dot_dimension_numbers<[1], [0], [0], [1], [0, 0, 1, 1], [], []>} : vector<8x8xf32>, vector<8x128xf32>, vector<8x128xf32> -> vector<8x128xf32>
    %61 = vector.broadcast %20 : vector<8x1xf32> to vector<8x128xf32>
    %62 = arith.addf %60, %61 : vector<8x128xf32>
    %c0_27 = arith.constant 0 : index
    %c0_28 = arith.constant 0 : index
    %63 = vector.load %arg7[%c0_27, %c0_28] : memref<4x8xf32, #tpu.memory_space<vmem>>, vector<4x8xf32>
    %cst_29 = arith.constant dense<0.000000e+00> : vector<4x128xf32>
    %64 = tpu.matmul %63, %3, %cst_29 {dimension_numbers = #tpu.dot_dimension_numbers<[1], [0], [0], [1], [0, 0, 1, 1], [], []>} : vector<4x8xf32>, vector<8x128xf32>, vector<4x128xf32> -> vector<4x128xf32>
    %65 = vector.broadcast %21 : vector<4x1xf32> to vector<4x128xf32>
    %66 = arith.addf %64, %65 : vector<4x128xf32>
    %67 = vector.extract_strided_slice %62 {offsets = [0, 0], sizes = [4, 128], strides = [1, 1]} : vector<8x128xf32> to vector<4x128xf32>
    %68 = vector.extract_strided_slice %62 {offsets = [4, 0], sizes = [4, 128], strides = [1, 1]} : vector<8x128xf32> to vector<4x128xf32>
    %cst_30 = arith.constant dense<0.000000e+00> : vector<128x128xf32>
    %69 = tpu.matmul %67, %68, %cst_30 {dimension_numbers = #tpu.dot_dimension_numbers<[0], [0], [1], [1], [0, 1, 1, 1], [], []>} : vector<4x128xf32>, vector<4x128xf32>, vector<128x128xf32> -> vector<128x128xf32>
    %cst_31 = arith.constant 5.000000e-01 : f32
    %70 = vector.broadcast %cst_31 : f32 to vector<128x128xf32>
    %71 = arith.mulf %69, %70 : vector<128x128xf32>
    %c16_i32_32 = arith.constant 16 : i32
    %72 = vector.broadcast %c16_i32_32 : i32 to vector<1x128xi32>
    %73 = arith.cmpi slt, %6, %72 : vector<1x128xi32>
    %cst_33 = arith.constant 9.99999997E-7 : f32
    %74 = vector.broadcast %cst_33 : f32 to vector<1x128xf32>
    %75 = arith.addf %5, %74 : vector<1x128xf32>
    %76 = math.log %75 : vector<1x128xf32>
    %cst_34 = arith.constant -1.000000e+30 : f32
    %77 = vector.broadcast %cst_34 : f32 to vector<1x128xf32>
    %78 = arith.select %73, %76, %77 : vector<1x128xi1>, vector<1x128xf32>
    %79 = vector.broadcast %78 : vector<1x128xf32> to vector<128x128xf32>
    %80 = arith.addf %71, %79 : vector<128x128xf32>
    %cst_35 = arith.constant dense<0xFF800000> : vector<128xf32>
    %81 = vector.multi_reduction <maximumf>, %80, %cst_35 [1] : vector<128x128xf32> to vector<128xf32>
    %82 = vector.shape_cast %81 : vector<128xf32> to vector<128x1xf32>
    %83 = vector.broadcast %82 : vector<128x1xf32> to vector<128x128xf32>
    %84 = arith.subf %80, %83 : vector<128x128xf32>
    %85 = math.exp %84 : vector<128x128xf32>
    %cst_36 = arith.constant dense<0.000000e+00> : vector<128xf32>
    %86 = vector.multi_reduction <add>, %85, %cst_36 [1] : vector<128x128xf32> to vector<128xf32>
    %87 = vector.shape_cast %86 : vector<128xf32> to vector<128x1xf32>
    %88 = tpu.reciprocal %87 {approx = true} : vector<128x1xf32> -> vector<128x1xf32>
    %89 = arith.mulf %87, %88 : vector<128x1xf32>
    %cst_37 = arith.constant 2.000000e+00 : f32
    %90 = vector.broadcast %cst_37 : f32 to vector<128x1xf32>
    %91 = arith.subf %90, %89 : vector<128x1xf32>
    %92 = arith.mulf %88, %91 : vector<128x1xf32>
    %93 = vector.broadcast %92 : vector<128x1xf32> to vector<128x128xf32>
    %94 = arith.mulf %85, %93 : vector<128x128xf32>
    %95 = vector.broadcast %5 : vector<1x128xf32> to vector<128x128xf32>
    %96 = arith.mulf %94, %95 : vector<128x128xf32>
    %cst_38 = arith.constant dense<0.000000e+00> : vector<4x128xf32>
    %97 = tpu.matmul %66, %96, %cst_38 {dimension_numbers = #tpu.dot_dimension_numbers<[1], [1], [0], [0], [0, 0, 1, 0], [], []>} : vector<4x128xf32>, vector<128x128xf32>, vector<4x128xf32> -> vector<4x128xf32>
    %c0_39 = arith.constant 0 : index
    %c0_40 = arith.constant 0 : index
    %98 = vector.load %arg8[%c0_39, %c0_40] : memref<8x4xf32, #tpu.memory_space<vmem>>, vector<8x4xf32>
    %cst_41 = arith.constant 0.000000e+00 : f32
    %99 = vector.broadcast %cst_41 : f32 to vector<4x128xf32>
    %100 = arith.maximumf %97, %99 : vector<4x128xf32>
    %cst_42 = arith.constant dense<0.000000e+00> : vector<8x128xf32>
    %101 = tpu.matmul %98, %100, %cst_42 {dimension_numbers = #tpu.dot_dimension_numbers<[1], [0], [0], [1], [0, 0, 1, 1], [], []>} : vector<8x4xf32>, vector<4x128xf32>, vector<8x128xf32> -> vector<8x128xf32>
    %102 = vector.broadcast %22 : vector<8x1xf32> to vector<8x128xf32>
    %103 = arith.addf %101, %102 : vector<8x128xf32>
    %104 = vector.broadcast %5 : vector<1x128xf32> to vector<8x128xf32>
    %105 = arith.mulf %103, %104 : vector<8x128xf32>
    %cst_43 = arith.constant 0.699999988 : f32
    %106 = vector.broadcast %cst_43 : f32 to vector<8x128xf32>
    %107 = arith.mulf %106, %105 : vector<8x128xf32>
    %108 = arith.addf %107, %36 : vector<8x128xf32>
    %c0_44 = arith.constant 0 : index
    %c0_45 = arith.constant 0 : index
    %109 = vector.load %arg9[%c0_44, %c0_45] : memref<8x8xf32, #tpu.memory_space<vmem>>, vector<8x8xf32>
    %cst_46 = arith.constant dense<0.000000e+00> : vector<8x128xf32>
    %110 = tpu.matmul %109, %108, %cst_46 {dimension_numbers = #tpu.dot_dimension_numbers<[1], [0], [0], [1], [0, 0, 1, 1], [], []>} : vector<8x8xf32>, vector<8x128xf32>, vector<8x128xf32> -> vector<8x128xf32>
    %111 = vector.broadcast %23 : vector<8x1xf32> to vector<8x128xf32>
    %112 = arith.addf %110, %111 : vector<8x128xf32>
    %113 = arith.addf %1, %112 : vector<8x128xf32>
    %114 = vector.broadcast %5 : vector<1x128xf32> to vector<8x128xf32>
    %115 = arith.mulf %113, %114 : vector<8x128xf32>
    %c0_47 = arith.constant 0 : index
    %c0_48 = arith.constant 0 : index
    %c0_49 = arith.constant 0 : index
    %116 = vector.load %arg11[%c0_47, %c0_48, %c0_49] : memref<1x8x128xf32, #tpu.memory_space<vmem>>, vector<1x8x128xf32>
    %117 = vector.shape_cast %116 : vector<1x8x128xf32> to vector<8x128xf32>
    %118 = vector.shape_cast %115 : vector<8x128xf32> to vector<1x8x128xf32>
    tpu.vector_store %arg11[%c0_47, %c0_48, %c0_49], %118 {strides = array<i32>} : memref<1x8x128xf32, #tpu.memory_space<vmem>>, vector<1x8x128xf32>,
    return
  }
  func.func @transform_0(%arg0: i32, %arg1: i32) -> (i32, i32, i32) {
    %c0_i32 = arith.constant 0 : i32
    %c0_i32_0 = arith.constant 0 : i32
    %c0_i32_1 = arith.constant 0 : i32
    return %arg0, %c0_i32, %c0_i32_0 : i32, i32, i32
  }
  func.func @transform_1(%arg0: i32, %arg1: i32) -> (i32, i32, i32) {
    %c0_i32 = arith.constant 0 : i32
    %c0_i32_0 = arith.constant 0 : i32
    %c0_i32_1 = arith.constant 0 : i32
    return %arg0, %c0_i32, %c0_i32_0 : i32, i32, i32
  }
  func.func @transform_2(%arg0: i32, %arg1: i32) -> (i32, i32, i32) {
    %c0_i32 = arith.constant 0 : i32
    %c0_i32_0 = arith.constant 0 : i32
    %c0_i32_1 = arith.constant 0 : i32
    return %arg0, %c0_i32, %c0_i32_0 : i32, i32, i32
  }
  func.func @transform_3(%arg0: i32, %arg1: i32) -> (i32, i32) {
    %c0_i32 = arith.constant 0 : i32
    %c0_i32_0 = arith.constant 0 : i32
    %c0_i32_1 = arith.constant 0 : i32
    return %c0_i32, %c0_i32_0 : i32, i32
  }
  func.func @transform_4(%arg0: i32, %arg1: i32) -> (i32, i32) {
    %c0_i32 = arith.constant 0 : i32
    %c0_i32_0 = arith.constant 0 : i32
    %c0_i32_1 = arith.constant 0 : i32
    return %c0_i32, %c0_i32_0 : i32, i32
  }
  func.func @transform_5(%arg0: i32, %arg1: i32) -> (i32, i32) {
    %c0_i32 = arith.constant 0 : i32
    %c0_i32_0 = arith.constant 0 : i32
    %c0_i32_1 = arith.constant 0 : i32
    return %c0_i32, %c0_i32_0 : i32, i32
  }
  func.func @transform_6(%arg0: i32, %arg1: i32) -> (i32, i32) {
    %c0_i32 = arith.constant 0 : i32
    %c0_i32_0 = arith.constant 0 : i32
    %c0_i32_1 = arith.constant 0 : i32
    return %c0_i32, %c0_i32_0 : i32, i32
  }
  func.func @transform_7(%arg0: i32, %arg1: i32) -> (i32, i32) {
    %c0_i32 = arith.constant 0 : i32
    %c0_i32_0 = arith.constant 0 : i32
    %c0_i32_1 = arith.constant 0 : i32
    return %c0_i32, %c0_i32_0 : i32, i32
  }
  func.func @transform_8(%arg0: i32, %arg1: i32) -> (i32, i32) {
    %c0_i32 = arith.constant 0 : i32
    %c0_i32_0 = arith.constant 0 : i32
    %c0_i32_1 = arith.constant 0 : i32
    return %c0_i32, %c0_i32_0 : i32, i32
  }
  func.func @transform_9(%arg0: i32, %arg1: i32) -> (i32, i32, i32) {
    %c0_i32 = arith.constant 0 : i32
    %c0_i32_0 = arith.constant 0 : i32
    return %arg0, %c0_i32, %arg1 : i32, i32, i32
  }
}

</mosaic_0001>

<llo_original>
// kernel: tpu_custom_call.1
$region0: #{tpu_custom_call.1}
  #allocation0 [shape = 'u32[]', space=smem, size = 0x4, offset = 0x4, fixed_abs, tag = 'smem constant byte address 0x4 - core index']
  #allocation1 [shape = 'u32[72,128]{1,0:T(1,128)}', space=vmem, size = 0x9000, scoped, tag = 'internal scratch']
  %s0 = inlined_call_operand.vmem [shape: f32[2,8,128], index: 0, kind: input, shape index: {}]
  %s1 = inlined_call_operand.vmem [shape: f32[2,8,128], index: 1, kind: input, shape index: {}]
  %s2 = inlined_call_operand.hbm [shape: f32[2,1,128], index: 2, kind: input, shape index: {}]
  %s3 = inlined_call_operand.vmem [shape: f32[8,24], index: 3, kind: input, shape index: {}]
  %s4 = inlined_call_operand.vmem [shape: f32[8,8], index: 4, kind: input, shape index: {}]
  %s5 = inlined_call_operand.vmem [shape: f32[4,8], index: 5, kind: input, shape index: {}]
  %s6 = inlined_call_operand.vmem [shape: f32[8,4], index: 6, kind: input, shape index: {}]
  %s7 = inlined_call_operand.hbm [shape: f32[8,8], index: 7, kind: input, shape index: {}]
  %s8 = inlined_call_operand.vmem [shape: f32[40,1], index: 8, kind: input, shape index: {}]
  %s9 = inlined_call_operand.hbm [shape: f32[2,8,128], index: 9, kind: output, shape index: {}]
  %s10 = sld [smem:[#allocation0]]
  $region77: #{tpu_custom_call.1} parent=0
    _
  %s12 = ssub.s32 1, %s10
  %s13 = scalar_select 0, %s12, %s10
  $region1: #{tpu_custom_call.1} parent=0
    #allocation2 [shape = 'u8[1024]{0}', space=vmem, size = 0x400, scoped, tag = 'input window, operand 2']
    #allocation3 [shape = 's32[2]{0}', space=sflag, size = 0x8, scoped, tag = 'scoped memory for tpu_custom_call.1']
    #allocation4 [shape = 's32[2]{0}', space=sflag, size = 0x8, scoped, tag = 'scoped memory for tpu_custom_call.1']
    #allocation5 [shape = 'u8[4096]{0}', space=vmem, size = 0x1000, scoped, tag = 'input window, operand 7, single buffered']
    #allocation6 [shape = 's32[1]{0}', space=sflag, size = 0x4, scoped, tag = 'scoped memory for tpu_custom_call.1']
    #allocation7 [shape = 'u8[8192]{0}', space=vmem, size = 0x2000, scoped, tag = 'output window, operand 0']
    %14 = vsyncpa [#allocation3], 0
    %s15 = scalar_lea.sflag [#allocation3], 1
    %16 = vsyncpa %s15, 0
    %17 = vsyncpa [#allocation6], 0
    %18 = vsyncpa [#allocation4], 0
    %s19 = scalar_lea.sflag [#allocation4], 1
    %20 = vsyncpa %s19, 0
    loop: start=0, step=1, limit=4
    $region2: #{tpu_custom_call.1} parent=1 // loop_pre_header
      _
    $region3: #{tpu_custom_call.1} parent=1 // loop_header
      %s22 = sphi 0, %s26
      %p23 = scmp.ge.s32.totalorder %s22, 4
      %s29 = sphi 0, %s41
      %s30 = sphi 0, %s37
      %s31 = sphi 0, %s29
      %s32 = sphi 0, %s30
      %s33 = sphi 0, %s31
      %s34 = sphi 0, %s32
      %s44 = sphi 0, %s46
      %s47 = sphi 0, %s44
      %s48 = sphi 0, %s47
      %s64 = sphi 0, %s48
      %s70 = sphi 0, %s72
      %s73 = sphi 0, %s70
      %s74 = sphi 0, %s73
      %s90 = sphi 0, %s74
      %s96 = sphi 0, %s98
      %s99 = sphi 0, %s96
      %s100 = sphi 0, %s99
      %s116 = sphi 0, %s100
      %s120 = sphi 0, %s120
      %s122 = sphi 0, %s120
      %s123 = sphi 0, %s122
      %s137 = sphi 0, %s123
      %s141 = sphi 0, %s141
      %s143 = sphi 0, %s141
      %s144 = sphi 0, %s143
      %s158 = sphi 0, %s144
      %s162 = sphi 0, %s162
      %s164 = sphi 0, %s162
      %s165 = sphi 0, %s164
      %s179 = sphi 0, %s165
      %s183 = sphi 0, %s183
      %s185 = sphi 0, %s183
      %s186 = sphi 0, %s185
      %s200 = sphi 0, %s186
      %s204 = sphi 0, %s204
      %s206 = sphi 0, %s204
      %s207 = sphi 0, %s206
      %s221 = sphi 0, %s207
      %s225 = sphi 0, %s225
      %s227 = sphi 0, %s225
      %s228 = sphi 0, %s227
      %s242 = sphi 0, %s228
      %s250 = sphi 0, %s252
      %s253 = sphi 0, %s250
      %s254 = sphi 0, %s253
      %s270 = sphi 0, %s254
    $region4: #{tpu_custom_call.1} parent=1 // loop_header_branch
      %25 = sbr.rel (%p23) target = $region8
    $region5: #{tpu_custom_call.1} parent=1 // loop_body
      %s27 = ssub.s32 %s22, 1
      %s28 = ssub.s32 %s22, 2
      %s35 = sadd.s32 1, %s30
      %p36 = scmp.ge.s32.totalorder %s35, 1
      %s37 = scalar_select %p36, 0, %s35
      %s38 = sadd.s32 1, %s29
      %s39 = scalar_select %p36, %s38, %s29
      %p40 = scmp.ge.s32.totalorder %s39, 2
      %s41 = scalar_select %p40, 0, %s39
      %s42 = ssub.s32 %s29, %s41
      %p43 = scmp.eq.s32.totalorder %s42, 0
      %s45 = sadd.s32 %s44, 1
      %s46 = scalar_select %p43, %s44, %s45
      %p49 = pneg %p43
      %p50 = scmp.eq.s32.totalorder %s22, 1
      %p51 = por %p49, %p50
      %p52 = scmp.ne.s32.totalorder %s44, %s47
      %p53 = scmp.eq.s32.totalorder %s22, 0
      %p54 = por %p52, %p53
      %p55 = scmp.ne.s32.totalorder %s44, %s47
      %p56 = scmp.eq.s32.totalorder %s27, 1
      %p57 = por %p55, %p56
      %p58 = scmp.ne.s32.totalorder %s47, %s48
      %p59 = scmp.eq.s32.totalorder %s27, 0
      %p60 = por %p58, %p59
      %p61 = scmp.ne.s32.totalorder %s47, %s48
      %p62 = scmp.eq.s32.totalorder %s28, 1
      %p63 = por %p61, %p62
      %p65 = scmp.ne.s32.totalorder %s48, %s64
      %p66 = scmp.eq.s32.totalorder %s28, 0
      %p67 = por %p65, %p66
      %s68 = ssub.s32 %s29, %s41
      %p69 = scmp.eq.s32.totalorder %s68, 0
      %s71 = sadd.s32 %s70, 1
      %s72 = scalar_select %p69, %s70, %s71
      %p75 = pneg %p69
      %p76 = scmp.eq.s32.totalorder %s22, 1
      %p77 = por %p75, %p76
      %p78 = scmp.ne.s32.totalorder %s70, %s73
      %p79 = scmp.eq.s32.totalorder %s22, 0
      %p80 = por %p78, %p79
      %p81 = scmp.ne.s32.totalorder %s70, %s73
      %p82 = scmp.eq.s32.totalorder %s27, 1
      %p83 = por %p81, %p82
      %p84 = scmp.ne.s32.totalorder %s73, %s74
      %p85 = scmp.eq.s32.totalorder %s27, 0
      %p86 = por %p84, %p85
      %p87 = scmp.ne.s32.totalorder %s73, %s74
      %p88 = scmp.eq.s32.totalorder %s28, 1
      %p89 = por %p87, %p88
      %p91 = scmp.ne.s32.totalorder %s74, %s90
      %p92 = scmp.eq.s32.totalorder %s28, 0
      %p93 = por %p91, %p92
      %s94 = ssub.s32 %s29, %s41
      %p95 = scmp.eq.s32.totalorder %s94, 0
      %s97 = sadd.s32 %s96, 1
      %s98 = scalar_select %p95, %s96, %s97
      %p101 = pneg %p95
      %p102 = scmp.eq.s32.totalorder %s22, 1
      %p103 = por %p101, %p102
      %p104 = scmp.ne.s32.totalorder %s96, %s99
      %p105 = scmp.eq.s32.totalorder %s22, 0
      %p106 = por %p104, %p105
      %p107 = scmp.ne.s32.totalorder %s96, %s99
      %p108 = scmp.eq.s32.totalorder %s27, 1
      %p109 = por %p107, %p108
      %p110 = scmp.ne.s32.totalorder %s99, %s100
      %p111 = scmp.eq.s32.totalorder %s27, 0
      %p112 = por %p110, %p111
      %p113 = scmp.ne.s32.totalorder %s99, %s100
      %p114 = scmp.eq.s32.totalorder %s28, 1
      %p115 = por %p113, %p114
      %p117 = scmp.ne.s32.totalorder %s100, %s116
      %p118 = scmp.eq.s32.totalorder %s28, 0
      %p119 = por %p117, %p118
      %s121 = sadd.s32 %s120, 1
      %p124 = scmp.eq.s32.totalorder %s22, 1
      %p125 = scmp.ne.s32.totalorder %s120, %s122
      %p126 = scmp.eq.s32.totalorder %s22, 0
      %p127 = por %p125, %p126
      %p128 = scmp.ne.s32.totalorder %s120, %s122
      %p129 = scmp.eq.s32.totalorder %s27, 1
      %p130 = por %p128, %p129
      %p131 = scmp.ne.s32.totalorder %s122, %s123
      %p132 = scmp.eq.s32.totalorder %s27, 0
      %p133 = por %p131, %p132
      %p134 = scmp.ne.s32.totalorder %s122, %s123
      %p135 = scmp.eq.s32.totalorder %s28, 1
      %p136 = por %p134, %p135
      %p138 = scmp.ne.s32.totalorder %s123, %s137
      %p139 = scmp.eq.s32.totalorder %s28, 0
      %p140 = por %p138, %p139
      %s142 = sadd.s32 %s141, 1
      %p145 = scmp.eq.s32.totalorder %s22, 1
      %p146 = scmp.ne.s32.totalorder %s141, %s143
      %p147 = scmp.eq.s32.totalorder %s22, 0
      %p148 = por %p146, %p147
      %p149 = scmp.ne.s32.totalorder %s141, %s143
      %p150 = scmp.eq.s32.totalorder %s27, 1
      %p151 = por %p149, %p150
      %p152 = scmp.ne.s32.totalorder %s143, %s144
      %p153 = scmp.eq.s32.totalorder %s27, 0
      %p154 = por %p152, %p153
      %p155 = scmp.ne.s32.totalorder %s143, %s144
      %p156 = scmp.eq.s32.totalorder %s28, 1
      %p157 = por %p155, %p156
      %p159 = scmp.ne.s32.totalorder %s144, %s158
      %p160 = scmp.eq.s32.totalorder %s28, 0
      %p161 = por %p159, %p160
      %s163 = sadd.s32 %s162, 1
      %p166 = scmp.eq.s32.totalorder %s22, 1
      %p167 = scmp.ne.s32.totalorder %s162, %s164
      %p168 = scmp.eq.s32.totalorder %s22, 0
      %p169 = por %p167, %p168
      %p170 = scmp.ne.s32.totalorder %s162, %s164
      %p171 = scmp.eq.s32.totalorder %s27, 1
      %p172 = por %p170, %p171
      %p173 = scmp.ne.s32.totalorder %s164, %s165
      %p174 = scmp.eq.s32.totalorder %s27, 0
      %p175 = por %p173, %p174
      %p176 = scmp.ne.s32.totalorder %s164, %s165
      %p177 = scmp.eq.s32.totalorder %s28, 1
      %p178 = por %p176, %p177
      %p180 = scmp.ne.s32.totalorder %s165, %s179
      %p181 = scmp.eq.s32.totalorder %s28, 0
      %p182 = por %p180, %p181
      %s184 = sadd.s32 %s183, 1
      %p187 = scmp.eq.s32.totalorder %s22, 1
      %p188 = scmp.ne.s32.totalorder %s183, %s185
      %p189 = scmp.eq.s32.totalorder %s22, 0
      %p190 = por %p188, %p189
      %p191 = scmp.ne.s32.totalorder %s183, %s185
      %p192 = scmp.eq.s32.totalorder %s27, 1
      %p193 = por %p191, %p192
      %p194 = scmp.ne.s32.totalorder %s185, %s186
      %p195 = scmp.eq.s32.totalorder %s27, 0
      %p196 = por %p194, %p195
      %p197 = scmp.ne.s32.totalorder %s185, %s186
      %p198 = scmp.eq.s32.totalorder %s28, 1
      %p199 = por %p197, %p198
      %p201 = scmp.ne.s32.totalorder %s186, %s200
      %p202 = scmp.eq.s32.totalorder %s28, 0
      %p203 = por %p201, %p202
      %s205 = sadd.s32 %s204, 1
      %p208 = scmp.eq.s32.totalorder %s22, 1
      %p209 = scmp.ne.s32.totalorder %s204, %s206
      %p210 = scmp.eq.s32.totalorder %s22, 0
      %p211 = por %p209, %p210
      %p212 = scmp.ne.s32.totalorder %s204, %s206
      %p213 = scmp.eq.s32.totalorder %s27, 1
      %p214 = por %p212, %p213
      %p215 = scmp.ne.s32.totalorder %s206, %s207
      %p216 = scmp.eq.s32.totalorder %s27, 0
      %p217 = por %p215, %p216
      %p218 = scmp.ne.s32.totalorder %s206, %s207
      %p219 = scmp.eq.s32.totalorder %s28, 1
      %p220 = por %p218, %p219
      %p222 = scmp.ne.s32.totalorder %s207, %s221
      %p223 = scmp.eq.s32.totalorder %s28, 0
      %p224 = por %p222, %p223
      %s226 = sadd.s32 %s225, 1
      %p229 = scmp.eq.s32.totalorder %s22, 1
      %p230 = scmp.ne.s32.totalorder %s225, %s227
      %p231 = scmp.eq.s32.totalorder %s22, 0
      %p232 = por %p230, %p231
      %p233 = scmp.ne.s32.totalorder %s225, %s227
      %p234 = scmp.eq.s32.totalorder %s27, 1
      %p235 = por %p233, %p234
      %p236 = scmp.ne.s32.totalorder %s227, %s228
      %p237 = scmp.eq.s32.totalorder %s27, 0
      %p238 = por %p236, %p237
      %p239 = scmp.ne.s32.totalorder %s227, %s228
      %p240 = scmp.eq.s32.totalorder %s28, 1
      %p241 = por %p239, %p240
      %p243 = scmp.ne.s32.totalorder %s228, %s242
      %p244 = scmp.eq.s32.totalorder %s28, 0
      %p245 = por %p243, %p244
      %s246 = ssub.s32 %s29, %s41
      %s247 = ssub.s32 %s30, %s37
      %s248 = sor.u32 %s246, %s247
      %p249 = scmp.eq.s32.totalorder %s248, 0
      %s251 = sadd.s32 %s250, 1
      %s252 = scalar_select %p249, %s250, %s251
      %p255 = pneg %p249
      %p256 = scmp.eq.s32.totalorder %s22, 1
      %p257 = por %p255, %p256
      %p258 = scmp.ne.s32.totalorder %s250, %s253
      %p259 = scmp.eq.s32.totalorder %s22, 0
      %p260 = por %p258, %p259
      %p261 = scmp.ne.s32.totalorder %s250, %s253
      %p262 = scmp.eq.s32.totalorder %s27, 1
      %p263 = por %p261, %p262
      %p264 = scmp.ne.s32.totalorder %s253, %s254
      %p265 = scmp.eq.s32.totalorder %s27, 0
      %p266 = por %p264, %p265
      %p267 = scmp.ne.s32.totalorder %s253, %s254
      %p268 = scmp.eq.s32.totalorder %s28, 1
      %p269 = por %p267, %p268
      %p271 = scmp.ne.s32.totalorder %s254, %s270
      %p272 = scmp.eq.s32.totalorder %s28, 0
      %p273 = por %p271, %p272
      %p274 = scmp.le.s32.totalorder 1, %s22
      %p275 = scmp.lt.s32.totalorder %s22, 3
      %p276 = pnand %p274, %p275
      %p277 = pneg %p276
      // Predicated region
      $region9: #{tpu_custom_call.1} parent=5 // pred_check
        _
      $region10: #{tpu_custom_call.1} parent=5 // pred_check_branch
        %279 = sbr.rel (%p276) target = $region12
      $region11: #{tpu_custom_call.1} parent=5 // pred_region
        %s280 = ssub.s32 %s22, 1
        // Predicated region
        $region13: #{tpu_custom_call.1} parent=11 // pred_check
          %p281 = pneg %p133
        $region14: #{tpu_custom_call.1} parent=11 // pred_check_branch
          %283 = sbr.rel (%p281) target = $region16
        $region15: #{tpu_custom_call.1} parent=11 // pred_region
          _
        $region16: #{tpu_custom_call.1} parent=11 // pred_fallthru
          _
        // Predicated region
        $region17: #{tpu_custom_call.1} parent=11 // pred_check
          %p284 = pneg %p154
        $region18: #{tpu_custom_call.1} parent=11 // pred_check_branch
          %286 = sbr.rel (%p284) target = $region20
        $region19: #{tpu_custom_call.1} parent=11 // pred_region
          _
        $region20: #{tpu_custom_call.1} parent=11 // pred_fallthru
          _
        // Predicated region
        $region21: #{tpu_custom_call.1} parent=11 // pred_check
          %p287 = pneg %p175
        $region22: #{tpu_custom_call.1} parent=11 // pred_check_branch
          %289 = sbr.rel (%p287) target = $region24
        $region23: #{tpu_custom_call.1} parent=11 // pred_region
          _
        $region24: #{tpu_custom_call.1} parent=11 // pred_fallthru
          _
        // Predicated region
        $region25: #{tpu_custom_call.1} parent=11 // pred_check
          %p290 = pneg %p196
        $region26: #{tpu_custom_call.1} parent=11 // pred_check_branch
          %292 = sbr.rel (%p290) target = $region28
        $region27: #{tpu_custom_call.1} parent=11 // pred_region
          _
        $region28: #{tpu_custom_call.1} parent=11 // pred_fallthru
          _
        // Predicated region
        $region29: #{tpu_custom_call.1} parent=11 // pred_check
          %p293 = pneg %p217
        $region30: #{tpu_custom_call.1} parent=11 // pred_check_branch
          %295 = sbr.rel (%p293) target = $region32
        $region31: #{tpu_custom_call.1} parent=11 // pred_region
          %297 = vsyncadd [#allocation6], 0
          %s299 = sshll.u32 %s7, 4
          %s300 = int_to_ptr.hbm [resolvable:$true] %s299
          %s301 = sshll.u32 [#allocation5], 4
          %s302 = int_to_ptr.vmem [resolvable:$true] %s301
          %304 = dma.hbm_to_vmem [thread:$0]  %s300, 128, %s302, [#allocation6]
        $region32: #{tpu_custom_call.1} parent=11 // pred_fallthru
          _
        // Predicated region
        $region33: #{tpu_custom_call.1} parent=11 // pred_check
          %p305 = pneg %p238
        $region34: #{tpu_custom_call.1} parent=11 // pred_check_branch
          %307 = sbr.rel (%p305) target = $region36
        $region35: #{tpu_custom_call.1} parent=11 // pred_region
          _
        $region36: #{tpu_custom_call.1} parent=11 // pred_fallthru
          _
      $region12: #{tpu_custom_call.1} parent=5 // pred_fallthru
        _
      %p308 = scmp.lt.s32.totalorder %s22, 2
      // Predicated region
      $region37: #{tpu_custom_call.1} parent=5 // pred_check
        %p309 = pneg %p308
      $region38: #{tpu_custom_call.1} parent=5 // pred_check_branch
        %311 = sbr.rel (%p309) target = $region40
      $region39: #{tpu_custom_call.1} parent=5 // pred_region
        // Predicated region
        $region41: #{tpu_custom_call.1} parent=39 // pred_check
          %p312 = pneg %p54
        $region42: #{tpu_custom_call.1} parent=39 // pred_check_branch
          %314 = sbr.rel (%p312) target = $region44
        $region43: #{tpu_custom_call.1} parent=39 // pred_region
          %p315 = scmp.lt.s32.totalorder %s29, 1
          %s316 = scalar_select %p315, %s29, 1
          %s317 = smul.addr %s316, 8
          %s318 = scalar_lea.vmem %s0, %s317
        $region44: #{tpu_custom_call.1} parent=39 // pred_fallthru
          _
        // Predicated region
        $region45: #{tpu_custom_call.1} parent=39 // pred_check
          %p319 = pneg %p80
        $region46: #{tpu_custom_call.1} parent=39 // pred_check_branch
          %321 = sbr.rel (%p319) target = $region48
        $region47: #{tpu_custom_call.1} parent=39 // pred_region
          %p322 = scmp.lt.s32.totalorder %s29, 1
          %s323 = scalar_select %p322, %s29, 1
          %s324 = smul.addr %s323, 8
          %s325 = scalar_lea.vmem %s1, %s324
        $region48: #{tpu_custom_call.1} parent=39 // pred_fallthru
          _
        // Predicated region
        $region49: #{tpu_custom_call.1} parent=39 // pred_check
          %p326 = pneg %p106
        $region50: #{tpu_custom_call.1} parent=39 // pred_check_branch
          %328 = sbr.rel (%p326) target = $region52
        $region51: #{tpu_custom_call.1} parent=39 // pred_region
          %s329 = sand.u32 %s96, 1
          %s330 = scalar_lea.sflag [#allocation3], %s329
          %s331 = sand.u32 %s96, 1
          %s332 = scalar_lea.vmem [#allocation2], %s331
          %334 = vsyncadd %s330, 0
          %s335 = scalar_lea.hbm %s2, %s29
          %s337 = sshll.u32 %s335, 4
          %s338 = int_to_ptr.hbm [resolvable:$true] %s337
          %s339 = sshll.u32 %s332, 4
          %s340 = int_to_ptr.vmem [resolvable:$true] %s339
          %342 = dma.hbm_to_vmem [thread:$0]  %s338, 16, %s340, %s330
        $region52: #{tpu_custom_call.1} parent=39 // pred_fallthru
          _
      $region40: #{tpu_custom_call.1} parent=5 // pred_fallthru
        _
      %p343 = scmp.le.s32.totalorder 1, %s22
      %p344 = scmp.lt.s32.totalorder %s22, 3
      %p345 = pnand %p343, %p344
      %p346 = pneg %p345
      // Predicated region
      $region53: #{tpu_custom_call.1} parent=5 // pred_check
        _
      $region54: #{tpu_custom_call.1} parent=5 // pred_check_branch
        %348 = sbr.rel (%p345) target = $region56
      $region55: #{tpu_custom_call.1} parent=5 // pred_region
        %s349 = ssub.s32 %s22, 1
        %s350 = sand.u32 %s99, 1
        %s351 = scalar_lea.sflag [#allocation3], %s350
        %s352 = sand.u32 %s99, 1
        %s353 = scalar_lea.vmem [#allocation2], %s352
        // Predicated region
        $region57: #{tpu_custom_call.1} parent=55 // pred_check
          %p354 = pneg %p112
        $region58: #{tpu_custom_call.1} parent=55 // pred_check_branch
          %356 = sbr.rel (%p354) target = $region60
        $region59: #{tpu_custom_call.1} parent=55 // pred_region
          %358 = dma.done %s351, 16
        $region60: #{tpu_custom_call.1} parent=55 // pred_fallthru
          _
        // Predicated region
        $region61: #{tpu_custom_call.1} parent=55 // pred_check
          %p359 = pneg %p217
        $region62: #{tpu_custom_call.1} parent=55 // pred_check_branch
          %361 = sbr.rel (%p359) target = $region64
        $region63: #{tpu_custom_call.1} parent=55 // pred_region
          %363 = dma.done [#allocation6], 128
        $region64: #{tpu_custom_call.1} parent=55 // pred_fallthru
          _
        %p364 = scmp.lt.s32.totalorder %s31, 1
        %s365 = scalar_select %p364, %s31, 1
        %s366 = smul.addr %s365, 8
        %s367 = scalar_lea.vmem %s0, %s366
        %p368 = pneg %p60
        %p369 = pneg %p57
        %p370 = scmp.lt.s32.totalorder %s31, 1
        %s371 = scalar_select %p370, %s31, 1
        %s372 = smul.addr %s371, 8
        %s373 = scalar_lea.vmem %s1, %s372
        %p374 = pneg %p86
        %p375 = pneg %p83
        %s376 = sand.u32 %s99, 1
        %s377 = scalar_lea.sflag [#allocation3], %s376
        %s378 = sand.u32 %s99, 1
        %s379 = scalar_lea.vmem [#allocation2], %s378
        %p380 = pneg %p112
        %p381 = pneg %p109
        %p382 = pneg %p133
        %p383 = pneg %p130
        %p384 = pneg %p154
        %p385 = pneg %p151
        %p386 = pneg %p175
        %p387 = pneg %p172
        %p388 = pneg %p196
        %p389 = pneg %p193
        %p390 = pneg %p217
        %p391 = pneg %p214
        %p392 = pneg %p238
        %p393 = pneg %p235
        %p394 = pneg %p266
        %p395 = pneg %p263
        %s396 = sand.u32 %s253, 1
        %s397 = scalar_lea.sflag [#allocation4], %s396
        %s398 = sand.u32 %s253, 1
        %s399 = smul.addr %s398, 8
        %s400 = scalar_lea.vmem [#allocation7], %s399
        %p401 = scmp.lt.s32.totalorder %s31, 1
        %s402 = scalar_select %p401, %s31, 1
        %s403 = smul.addr %s402, 8
        %s404 = scalar_lea.vmem %s0, %s403
        %p405 = scmp.lt.s32.totalorder %s31, 1
        %s406 = scalar_select %p405, %s31, 1
        %s407 = smul.addr %s406, 8
        %s408 = scalar_lea.vmem %s1, %s407
        %v409 = vld [vmem:[%s404] sm:$0xff]
        %v410 = vld [vmem:[%s408] sm:$0xff]
        %v411 = vld [vmem:[%s353] sm:$0x1]
        %v412 = vlaneseq
        %v413 = vand.u32 %v412, 127
        %vm414 = vcmp.ge.s32.totalorder %v413, 1
        %v415 = vsel %vm414, 1, 0
        %v416 = vcvt.s32.f32 %v415
        %vm417 = vcmp.lt.s32.totalorder %v413, 127
        %v418 = vsel %vm417, 1, 0
        %v419 = vcvt.s32.f32 %v418
        %vm420 = vcmp.lt.s32.totalorder %v413, 16
        %v421 = vsel %vm420, 1, 0
        %v422 = vcvt.s32.f32 %v421
        %v423 = vld [vmem:[%s8] sm:$0xff]
        %v424 = vld [vmem:[%s8 + $0x8] sm:$0xff]
        %v425 = vld [vmem:[%s8 + $0x10] sm:$0xf]
        %v426 = vld [vmem:[%s8 + $0x18] sm:$0xff]
        %v427 = vld [vmem:[%s8 + $0x20] sm:$0xff]
        %428 = vrot.lane.b32.xlu0 %v409, 1
        %v429 = vpop.permute.xlu0 %428
        %v430 = vmul.f32 %v429, %v416
        %431 = vrot.lane.b32.xlu0 %v409, 127
        %v432 = vpop.permute.xlu0 %431
        %v433 = vmul.f32 %v432, %v419
        %v434 = vld [vmem:[%s3] sm:$0xff]
        %436 = vset.pattern.permute.xlu0 0
        %437 = vperm.xlu0 %436, %v423
        %v438 = vpop.permute.xlu0 %437
        %vm440 = vcmask 195584
        %v442 = vsel %vm440, %v434, 0
        %444 = vmatpush.msra.mxu0 0.0
        %445 = vmatpush.msra.mxu0 0.0
        %446 = vmatpush.msra.mxu0 0.0
        %447 = vmatpush.msra.mxu0 0.0
        %448 = vmatpush.msra.mxu0 0.0
        %449 = vmatpush.msra.mxu0 0.0
        %450 = vmatpush.msra.mxu0 0.0
        %451 = vmatpush.msra.mxu0 0.0
        %452 = vmatpush.msra.mxu0 0.0
        %453 = vmatpush.msra.mxu0 0.0
        %454 = vmatpush.msra.mxu0 0.0
        %455 = vmatpush.msra.mxu0 0.0
        %456 = vmatpush.msra.mxu0 0.0
        %457 = vmatpush.msra.mxu0 %v433
        %458 = vmatpush.msra.mxu0 %v409
        %459 = vmatpush.msra.mxu0 %v430
        %460 = vmatmul.f32.gmra.mxu0 %v442
        %v461 = vpop.f32.mrf.mxu0
        %v462 = vadd.f32 %v438, %v461
        %463 = vdwg.mxu0
        %v464 = vmax.f32 %v462, 0.0
        %v465 = vmul.f32 %v464, %v422
        %466 = vadd.xlane.f32.xlu0 %v465
        %v467 = vpop.xlane.xlu0 %466
        %v468 = vmul.f32 %v467, 0.0625
        %v469 = vsub.f32 %v464, %v468
        %v470 = vmul.f32 %v469, %v422
        %v471 = vmul.f32 %v470, %v470
        %472 = vadd.xlane.f32.xlu0 %v471
        %v473 = vpop.xlane.xlu0 %472
        %v474 = vmul.f32 %v473, 0.0625
        %v475 = vadd.f32 %v474, 1e-05
        %v476 = vrsqrt.pop %v475
        %v477 = vmul.f32 %v476, %v475
        %v478 = vmul.f32 %v477, %v476
        %v479 = vmul.f32 0.5, %v478
        %v480 = vsub.f32 1.5, %v479
        %v481 = vmul.f32 %v476, %v480
        %vm482 = vweird.f32 %v475
        %vm483 = vweird.f32 %v476
        %vm484 = vmor %vm482, %vm483
        %v485 = vsel %vm484, %v476, %v481
        %v486 = vmul.f32 %v469, %v485
        %v487 = vld [vmem:[%s4] sm:$0xff]
        %489 = vset.pattern.permute.xlu0 0
        %490 = vperm.xlu0 %489, %v424
        %v491 = vpop.permute.xlu0 %490
        %vm493 = vcmask 64512
        %v495 = vsel %vm493, %v487, 0
        %497 = vmatpush.msra.mxu0 0.0
        %498 = vmatpush.msra.mxu0 0.0
        %499 = vmatpush.msra.mxu0 0.0
        %500 = vmatpush.msra.mxu0 0.0
        %501 = vmatpush.msra.mxu0 0.0
        %502 = vmatpush.msra.mxu0 0.0
        %503 = vmatpush.msra.mxu0 0.0
        %504 = vmatpush.msra.mxu0 0.0
        %505 = vmatpush.msra.mxu0 0.0
        %506 = vmatpush.msra.mxu0 0.0
        %507 = vmatpush.msra.mxu0 0.0
        %508 = vmatpush.msra.mxu0 0.0
        %509 = vmatpush.msra.mxu0 0.0
        %510 = vmatpush.msra.mxu0 0.0
        %511 = vmatpush.msra.mxu0 0.0
        %512 = vmatpush.msra.mxu0 %v486
        %513 = vmatmul.f32.gmra.mxu0 %v495
        %v514 = vpop.f32.mrf.mxu0
        %v515 = vadd.f32 %v491, %v514
        %516 = vdwg.mxu0
        %v517 = vld [vmem:[%s5] sm:$0xf]
        %519 = vset.pattern.permute.xlu0 0
        %520 = vperm.xlu0 %519, %v425
        %v521 = vpop.permute.xlu0 %520
        %v524 = vsel %vm493, %v517, 0
        %526 = vmatpush.msra.mxu0 0.0
        %527 = vmatpush.msra.mxu0 0.0
        %528 = vmatpush.msra.mxu0 0.0
        %529 = vmatpush.msra.mxu0 0.0
        %530 = vmatpush.msra.mxu0 0.0
        %531 = vmatpush.msra.mxu0 0.0
        %532 = vmatpush.msra.mxu0 0.0
        %533 = vmatpush.msra.mxu0 0.0
        %534 = vmatpush.msra.mxu0 0.0
        %535 = vmatpush.msra.mxu0 0.0
        %536 = vmatpush.msra.mxu0 0.0
        %537 = vmatpush.msra.mxu0 0.0
        %538 = vmatpush.msra.mxu0 0.0
        %539 = vmatpush.msra.mxu0 0.0
        %540 = vmatpush.msra.mxu0 0.0
        %541 = vmatpush.msra.mxu0 %v410
        %542 = vmatmul.f32.gmra.mxu0 %v524
        %v543 = vpop.f32.mrf.mxu0
        %v544 = vadd.f32 %v521, %v543
        %545 = vdwg.mxu0
        %546 = vxpose.xlu0.b32.start [1/16] %v515, 128
        %547 = vxpose.xlu0.b32.cont [2/16] 0.0, 128
        %548 = vxpose.xlu0.b32.cont [3/16] 0.0, 128
        %549 = vxpose.xlu0.b32.cont [4/16] 0.0, 128
        %550 = vxpose.xlu0.b32.cont [5/16] 0.0, 128
        %551 = vxpose.xlu0.b32.cont [6/16] 0.0, 128
        %552 = vxpose.xlu0.b32.cont [7/16] 0.0, 128
        %553 = vxpose.xlu0.b32.cont [8/16] 0.0, 128
        %554 = vxpose.xlu0.b32.cont [9/16] 0.0, 128
        %555 = vxpose.xlu0.b32.cont [10/16] 0.0, 128
        %556 = vxpose.xlu0.b32.cont [11/16] 0.0, 128
        %557 = vxpose.xlu0.b32.cont [12/16] 0.0, 128
        %558 = vxpose.xlu0.b32.cont [13/16] 0.0, 128
        %559 = vxpose.xlu0.b32.cont [14/16] 0.0, 128
        %560 = vxpose.xlu0.b32.cont [15/16] 0.0, 128
        %561 = vxpose.xlu0.b32.end [16/16] 0.0, 128
        %v562 = vpop.trf.xlu0
        %v563 = vpop.trf.xlu0
        %v564 = vpop.trf.xlu0
        %v565 = vpop.trf.xlu0
        %v566 = vpop.trf.xlu0
        %v567 = vpop.trf.xlu0
        %v568 = vpop.trf.xlu0
        %v569 = vpop.trf.xlu0
        %v570 = vpop.trf.xlu0
        %v571 = vpop.trf.xlu0
        %v572 = vpop.trf.xlu0
        %v573 = vpop.trf.xlu0
        %v574 = vpop.trf.xlu0
        %v575 = vpop.trf.xlu0
        %v576 = vpop.trf.xlu0
        %v577 = vpop.trf.xlu0
        %v579 = vrot.slane %v515, 4
        %vm580 = vcmask 31744
        %v582 = vsel %vm580, %v562, 0
        %v585 = vsel %vm580, %v563, 0
        %v588 = vsel %vm580, %v564, 0
        %v591 = vsel %vm580, %v565, 0
        %v594 = vsel %vm580, %v566, 0
        %v597 = vsel %vm580, %v567, 0
        %v600 = vsel %vm580, %v568, 0
        %v603 = vsel %vm580, %v569, 0
        %v606 = vsel %vm580, %v570, 0
        %v609 = vsel %vm580, %v571, 0
        %v612 = vsel %vm580, %v572, 0
        %v615 = vsel %vm580, %v573, 0
        %v618 = vsel %vm580, %v574, 0
        %v621 = vsel %vm580, %v575, 0
        %v624 = vsel %vm580, %v576, 0
        %v627 = vsel %vm580, %v577, 0
        %vm629 = vcmask 1043456
        %v630 = vsel %vm629, %v579, 0
        %632 = vmatpush.msra.mxu0 0.0
        %633 = vmatpush.msra.mxu0 0.0
        %634 = vmatpush.msra.mxu0 0.0
        %635 = vmatpush.msra.mxu0 0.0
        %636 = vmatpush.msra.mxu0 0.0
        %637 = vmatpush.msra.mxu0 0.0
        %638 = vmatpush.msra.mxu0 0.0
        %639 = vmatpush.msra.mxu0 0.0
        %640 = vmatpush.msra.mxu0 0.0
        %641 = vmatpush.msra.mxu0 0.0
        %642 = vmatpush.msra.mxu0 0.0
        %643 = vmatpush.msra.mxu0 0.0
        %644 = vmatpush.msra.mxu0 0.0
        %645 = vmatpush.msra.mxu0 0.0
        %646 = vmatpush.msra.mxu0 0.0
        %647 = vmatpush.msra.mxu0 %v630
        %648 = vmatmul.f32.gmra.mxu0 %v582
        %v649 = vpop.f32.mrf.mxu0
        %v650 = vadd.f32 0.0, %v649
        %651 = vmatmul.f32.gmra.mxu0 %v585
        %v652 = vpop.f32.mrf.mxu0
        %v653 = vadd.f32 0.0, %v652
        %654 = vmatmul.f32.gmra.mxu0 %v588
        %v655 = vpop.f32.mrf.mxu0
        %v656 = vadd.f32 0.0, %v655
        %657 = vmatmul.f32.gmra.mxu0 %v591
        %v658 = vpop.f32.mrf.mxu0
        %v659 = vadd.f32 0.0, %v658
        %660 = vmatmul.f32.gmra.mxu0 %v594
        %v661 = vpop.f32.mrf.mxu0
        %v662 = vadd.f32 0.0, %v661
        %663 = vmatmul.f32.gmra.mxu0 %v597
        %v664 = vpop.f32.mrf.mxu0
        %v665 = vadd.f32 0.0, %v664
        %666 = vmatmul.f32.gmra.mxu0 %v600
        %v667 = vpop.f32.mrf.mxu0
        %v668 = vadd.f32 0.0, %v667
        %669 = vmatmul.f32.gmra.mxu0 %v603
        %v670 = vpop.f32.mrf.mxu0
        %v671 = vadd.f32 0.0, %v670
        %672 = vmatmul.f32.gmra.mxu0 %v606
        %v673 = vpop.f32.mrf.mxu0
        %v674 = vadd.f32 0.0, %v673
        %675 = vmatmul.f32.gmra.mxu0 %v609
        %v676 = vpop.f32.mrf.mxu0
        %v677 = vadd.f32 0.0, %v676
        %678 = vmatmul.f32.gmra.mxu0 %v612
        %v679 = vpop.f32.mrf.mxu0
        %v680 = vadd.f32 0.0, %v679
        %681 = vmatmul.f32.gmra.mxu0 %v615
        %v682 = vpop.f32.mrf.mxu0
        %v683 = vadd.f32 0.0, %v682
        %684 = vmatmul.f32.gmra.mxu0 %v618
        %v685 = vpop.f32.mrf.mxu0
        %v686 = vadd.f32 0.0, %v685
        %687 = vmatmul.f32.gmra.mxu0 %v621
        %v688 = vpop.f32.mrf.mxu0
        %v689 = vadd.f32 0.0, %v688
        %690 = vmatmul.f32.gmra.mxu0 %v624
        %v691 = vpop.f32.mrf.mxu0
        %v692 = vadd.f32 0.0, %v691
        %693 = vmatmul.f32.gmra.mxu0 %v627
        %v694 = vpop.f32.mrf.mxu0
        %v695 = vadd.f32 0.0, %v694
        %696 = vdwg.mxu0
        %v697 = vmul.f32 %v650, 0.5
        %v698 = vmul.f32 %v653, 0.5
        %v699 = vmul.f32 %v656, 0.5
        %v700 = vmul.f32 %v659, 0.5
        %v701 = vmul.f32 %v662, 0.5
        %v702 = vmul.f32 %v665, 0.5
        %v703 = vmul.f32 %v668, 0.5
        %v704 = vmul.f32 %v671, 0.5
        %v705 = vmul.f32 %v674, 0.5
        %v706 = vmul.f32 %v677, 0.5
        %v707 = vmul.f32 %v680, 0.5
        %v708 = vmul.f32 %v683, 0.5
        %v709 = vmul.f32 %v686, 0.5
        %v710 = vmul.f32 %v689, 0.5
        %v711 = vmul.f32 %v692, 0.5
        %v712 = vmul.f32 %v695, 0.5
        %v713 = vadd.f32 %v411, 1e-06
        %v714 = vlog2.pop %v713
        %v715 = vmul.f32 %v714, 0.6931472
        %v716 = vsel %vm420, %v715, -1e+30
        %v717 = vperm.slane %v716, 0
        %v718 = vadd.f32 %v697, %v717
        %v719 = vadd.f32 %v698, %v717
        %v720 = vadd.f32 %v699, %v717
        %v721 = vadd.f32 %v700, %v717
        %v722 = vadd.f32 %v701, %v717
        %v723 = vadd.f32 %v702, %v717
        %v724 = vadd.f32 %v703, %v717
        %v725 = vadd.f32 %v704, %v717
        %v726 = vadd.f32 %v705, %v717
        %v727 = vadd.f32 %v706, %v717
        %v728 = vadd.f32 %v707, %v717
        %v729 = vadd.f32 %v708, %v717
        %v730 = vadd.f32 %v709, %v717
        %v731 = vadd.f32 %v710, %v717
        %v732 = vadd.f32 %v711, %v717
        %v733 = vadd.f32 %v712, %v717
        %734 = vmax.xlane.f32.xlu0 %v718
        %v735 = vpop.xlane.xlu0 %734
        %736 = vmax.xlane.f32.xlu0 %v719
        %v737 = vpop.xlane.xlu0 %736
        %738 = vmax.xlane.f32.xlu0 %v720
        %v739 = vpop.xlane.xlu0 %738
        %740 = vmax.xlane.f32.xlu0 %v721
        %v741 = vpop.xlane.xlu0 %740
        %742 = vmax.xlane.f32.xlu0 %v722
        %v743 = vpop.xlane.xlu0 %742
        %744 = vmax.xlane.f32.xlu0 %v723
        %v745 = vpop.xlane.xlu0 %744
        %746 = vmax.xlane.f32.xlu0 %v724
        %v747 = vpop.xlane.xlu0 %746
        %748 = vmax.xlane.f32.xlu0 %v725
        %v749 = vpop.xlane.xlu0 %748
        %750 = vmax.xlane.f32.xlu0 %v726
        %v751 = vpop.xlane.xlu0 %750
        %752 = vmax.xlane.f32.xlu0 %v727
        %v753 = vpop.xlane.xlu0 %752
        %754 = vmax.xlane.f32.xlu0 %v728
        %v755 = vpop.xlane.xlu0 %754
        %756 = vmax.xlane.f32.xlu0 %v729
        %v757 = vpop.xlane.xlu0 %756
        %758 = vmax.xlane.f32.xlu0 %v730
        %v759 = vpop.xlane.xlu0 %758
        %760 = vmax.xlane.f32.xlu0 %v731
        %v761 = vpop.xlane.xlu0 %760
        %762 = vmax.xlane.f32.xlu0 %v732
        %v763 = vpop.xlane.xlu0 %762
        %764 = vmax.xlane.f32.xlu0 %v733
        %v765 = vpop.xlane.xlu0 %764
        %v766 = vsub.f32 %v718, %v735
        %v767 = vsub.f32 %v719, %v737
        %v768 = vsub.f32 %v720, %v739
        %v769 = vsub.f32 %v721, %v741
        %v770 = vsub.f32 %v722, %v743
        %v771 = vsub.f32 %v723, %v745
        %v772 = vsub.f32 %v724, %v747
        %v773 = vsub.f32 %v725, %v749
        %v774 = vsub.f32 %v726, %v751
        %v775 = vsub.f32 %v727, %v753
        %v776 = vsub.f32 %v728, %v755
        %v777 = vsub.f32 %v729, %v757
        %v778 = vsub.f32 %v730, %v759
        %v779 = vsub.f32 %v731, %v761
        %v780 = vsub.f32 %v732, %v763
        %v781 = vsub.f32 %v733, %v765
        %v782 = vmul.f32 %v766, 1.442695
        %v783 = vpow.pop %v782
        %v784 = vmul.f32 %v767, 1.442695
        %v785 = vpow.pop %v784
        %v786 = vmul.f32 %v768, 1.442695
        %v787 = vpow.pop %v786
        %v788 = vmul.f32 %v769, 1.442695
        %v789 = vpow.pop %v788
        %v790 = vmul.f32 %v770, 1.442695
        %v791 = vpow.pop %v790
        %v792 = vmul.f32 %v771, 1.442695
        %v793 = vpow.pop %v792
        %v794 = vmul.f32 %v772, 1.442695
        %v795 = vpow.pop %v794
        %v796 = vmul.f32 %v773, 1.442695
        %v797 = vpow.pop %v796
        %v798 = vmul.f32 %v774, 1.442695
        %v799 = vpow.pop %v798
        %v800 = vmul.f32 %v775, 1.442695
        %v801 = vpow.pop %v800
        %v802 = vmul.f32 %v776, 1.442695
        %v803 = vpow.pop %v802
        %v804 = vmul.f32 %v777, 1.442695
        %v805 = vpow.pop %v804
        %v806 = vmul.f32 %v778, 1.442695
        %v807 = vpow.pop %v806
        %v808 = vmul.f32 %v779, 1.442695
        %v809 = vpow.pop %v808
        %v810 = vmul.f32 %v780, 1.442695
        %v811 = vpow.pop %v810
        %v812 = vmul.f32 %v781, 1.442695
        %v813 = vpow.pop %v812
        %814 = vadd.xlane.f32.xlu0 %v783
        %v815 = vpop.xlane.xlu0 %814
        %816 = vadd.xlane.f32.xlu0 %v785
        %v817 = vpop.xlane.xlu0 %816
        %818 = vadd.xlane.f32.xlu0 %v787
        %v819 = vpop.xlane.xlu0 %818
        %820 = vadd.xlane.f32.xlu0 %v789
        %v821 = vpop.xlane.xlu0 %820
        %822 = vadd.xlane.f32.xlu0 %v791
        %v823 = vpop.xlane.xlu0 %822
        %824 = vadd.xlane.f32.xlu0 %v793
        %v825 = vpop.xlane.xlu0 %824
        %826 = vadd.xlane.f32.xlu0 %v795
        %v827 = vpop.xlane.xlu0 %826
        %828 = vadd.xlane.f32.xlu0 %v797
        %v829 = vpop.xlane.xlu0 %828
        %830 = vadd.xlane.f32.xlu0 %v799
        %v831 = vpop.xlane.xlu0 %830
        %832 = vadd.xlane.f32.xlu0 %v801
        %v833 = vpop.xlane.xlu0 %832
        %834 = vadd.xlane.f32.xlu0 %v803
        %v835 = vpop.xlane.xlu0 %834
        %836 = vadd.xlane.f32.xlu0 %v805
        %v837 = vpop.xlane.xlu0 %836
        %838 = vadd.xlane.f32.xlu0 %v807
        %v839 = vpop.xlane.xlu0 %838
        %840 = vadd.xlane.f32.xlu0 %v809
        %v841 = vpop.xlane.xlu0 %840
        %842 = vadd.xlane.f32.xlu0 %v811
        %v843 = vpop.xlane.xlu0 %842
        %844 = vadd.xlane.f32.xlu0 %v813
        %v845 = vpop.xlane.xlu0 %844
        %v846 = vrcp.pop %v815
        %v847 = vrcp.pop %v817
        %v848 = vrcp.pop %v819
        %v849 = vrcp.pop %v821
        %v850 = vrcp.pop %v823
        %v851 = vrcp.pop %v825
        %v852 = vrcp.pop %v827
        %v853 = vrcp.pop %v829
        %v854 = vrcp.pop %v831
        %v855 = vrcp.pop %v833
        %v856 = vrcp.pop %v835
        %v857 = vrcp.pop %v837
        %v858 = vrcp.pop %v839
        %v859 = vrcp.pop %v841
        %v860 = vrcp.pop %v843
        %v861 = vrcp.pop %v845
        %v862 = vmul.f32 %v815, %v846
        %v863 = vmul.f32 %v817, %v847
        %v864 = vmul.f32 %v819, %v848
        %v865 = vmul.f32 %v821, %v849
        %v866 = vmul.f32 %v823, %v850
        %v867 = vmul.f32 %v825, %v851
        %v868 = vmul.f32 %v827, %v852
        %v869 = vmul.f32 %v829, %v853
        %v870 = vmul.f32 %v831, %v854
        %v871 = vmul.f32 %v833, %v855
        %v872 = vmul.f32 %v835, %v856
        %v873 = vmul.f32 %v837, %v857
        %v874 = vmul.f32 %v839, %v858
        %v875 = vmul.f32 %v841, %v859
        %v876 = vmul.f32 %v843, %v860
        %v877 = vmul.f32 %v845, %v861
        %v878 = vsub.f32 2.0, %v862
        %v879 = vsub.f32 2.0, %v863
        %v880 = vsub.f32 2.0, %v864
        %v881 = vsub.f32 2.0, %v865
        %v882 = vsub.f32 2.0, %v866
        %v883 = vsub.f32 2.0, %v867
        %v884 = vsub.f32 2.0, %v868
        %v885 = vsub.f32 2.0, %v869
        %v886 = vsub.f32 2.0, %v870
        %v887 = vsub.f32 2.0, %v871
        %v888 = vsub.f32 2.0, %v872
        %v889 = vsub.f32 2.0, %v873
        %v890 = vsub.f32 2.0, %v874
        %v891 = vsub.f32 2.0, %v875
        %v892 = vsub.f32 2.0, %v876
        %v893 = vsub.f32 2.0, %v877
        %v894 = vmul.f32 %v846, %v878
        %v895 = vmul.f32 %v847, %v879
        %v896 = vmul.f32 %v848, %v880
        %v897 = vmul.f32 %v849, %v881
        %v898 = vmul.f32 %v850, %v882
        %v899 = vmul.f32 %v851, %v883
        %v900 = vmul.f32 %v852, %v884
        %v901 = vmul.f32 %v853, %v885
        %v902 = vmul.f32 %v854, %v886
        %v903 = vmul.f32 %v855, %v887
        %v904 = vmul.f32 %v856, %v888
        %v905 = vmul.f32 %v857, %v889
        %v906 = vmul.f32 %v858, %v890
        %v907 = vmul.f32 %v859, %v891
        %v908 = vmul.f32 %v860, %v892
        %v909 = vmul.f32 %v861, %v893
        %v910 = vmul.f32 %v783, %v894
        %v911 = vmul.f32 %v785, %v895
        %v912 = vmul.f32 %v787, %v896
        %v913 = vmul.f32 %v789, %v897
        %v914 = vmul.f32 %v791, %v898
        %v915 = vmul.f32 %v793, %v899
        %v916 = vmul.f32 %v795, %v900
        %v917 = vmul.f32 %v797, %v901
        %v918 = vmul.f32 %v799, %v902
        %v919 = vmul.f32 %v801, %v903
        %v920 = vmul.f32 %v803, %v904
        %v921 = vmul.f32 %v805, %v905
        %v922 = vmul.f32 %v807, %v906
        %v923 = vmul.f32 %v809, %v907
        %v924 = vmul.f32 %v811, %v908
        %v925 = vmul.f32 %v813, %v909
        %v927 = vperm.slane %v411, 0
        %v929 = vmul.f32 %v910, %v927
        %v930 = vmul.f32 %v911, %v927
        %v931 = vmul.f32 %v912, %v927
        %v932 = vmul.f32 %v913, %v927
        %v933 = vmul.f32 %v914, %v927
        %v934 = vmul.f32 %v915, %v927
        %v935 = vmul.f32 %v916, %v927
        %v936 = vmul.f32 %v917, %v927
        %v937 = vmul.f32 %v918, %v927
        %v938 = vmul.f32 %v919, %v927
        %v939 = vmul.f32 %v920, %v927
        %v940 = vmul.f32 %v921, %v927
        %v941 = vmul.f32 %v922, %v927
        %v942 = vmul.f32 %v923, %v927
        %v943 = vmul.f32 %v924, %v927
        %v944 = vmul.f32 %v925, %v927
        %945 = vmatpush.xpose.msra.mxu0 %v944
        %946 = vmatpush.xpose.msra.mxu0 %v943
        %947 = vmatpush.xpose.msra.mxu0 %v942
        %948 = vmatpush.xpose.msra.mxu0 %v941
        %949 = vmatpush.xpose.msra.mxu0 %v940
        %950 = vmatpush.xpose.msra.mxu0 %v939
        %951 = vmatpush.xpose.msra.mxu0 %v938
        %952 = vmatpush.xpose.msra.mxu0 %v937
        %953 = vmatpush.xpose.msra.mxu0 %v936
        %954 = vmatpush.xpose.msra.mxu0 %v935
        %955 = vmatpush.xpose.msra.mxu0 %v934
        %956 = vmatpush.xpose.msra.mxu0 %v933
        %957 = vmatpush.xpose.msra.mxu0 %v932
        %958 = vmatpush.xpose.msra.mxu0 %v931
        %959 = vmatpush.xpose.msra.mxu0 %v930
        %960 = vmatpush.xpose.msra.mxu0 %v929
        %961 = vmatmul.f32.gmra.mxu0 %v544
        %v962 = vpop.f32.mrf.mxu0
        %v963 = vadd.f32 0.0, %v962
        %964 = vdwg.mxu0
        %v965 = vld [vmem:[%s6] sm:$0xff]
        %v966 = vmax.f32 %v963, 0.0
        %968 = vset.pattern.permute.xlu0 0
        %969 = vperm.xlu0 %968, %v426
        %v970 = vpop.permute.xlu0 %969
        %v973 = vsel %vm580, %v965, 0
        %v976 = vsel %vm629, %v966, 0
        %978 = vmatpush.msra.mxu0 0.0
        %979 = vmatpush.msra.mxu0 0.0
        %980 = vmatpush.msra.mxu0 0.0
        %981 = vmatpush.msra.mxu0 0.0
        %982 = vmatpush.msra.mxu0 0.0
        %983 = vmatpush.msra.mxu0 0.0
        %984 = vmatpush.msra.mxu0 0.0
        %985 = vmatpush.msra.mxu0 0.0
        %986 = vmatpush.msra.mxu0 0.0
        %987 = vmatpush.msra.mxu0 0.0
        %988 = vmatpush.msra.mxu0 0.0
        %989 = vmatpush.msra.mxu0 0.0
        %990 = vmatpush.msra.mxu0 0.0
        %991 = vmatpush.msra.mxu0 0.0
        %992 = vmatpush.msra.mxu0 0.0
        %993 = vmatpush.msra.mxu0 %v976
        %994 = vmatmul.f32.gmra.mxu0 %v973
        %v995 = vpop.f32.mrf.mxu0
        %v996 = vadd.f32 %v970, %v995
        %997 = vdwg.mxu0
        %v998 = vmul.f32 %v996, %v927
        %v999 = vmul.f32 %v998, 0.7
        %v1000 = vadd.f32 %v999, %v464
        %v1001 = vld [vmem:[#allocation5] sm:$0xff]
        %1003 = vset.pattern.permute.xlu0 0
        %1004 = vperm.xlu0 %1003, %v427
        %v1005 = vpop.permute.xlu0 %1004
        %v1008 = vsel %vm493, %v1001, 0
        %1010 = vmatpush.msra.mxu0 0.0
        %1011 = vmatpush.msra.mxu0 0.0
        %1012 = vmatpush.msra.mxu0 0.0
        %1013 = vmatpush.msra.mxu0 0.0
        %1014 = vmatpush.msra.mxu0 0.0
        %1015 = vmatpush.msra.mxu0 0.0
        %1016 = vmatpush.msra.mxu0 0.0
        %1017 = vmatpush.msra.mxu0 0.0
        %1018 = vmatpush.msra.mxu0 0.0
        %1019 = vmatpush.msra.mxu0 0.0
        %1020 = vmatpush.msra.mxu0 0.0
        %1021 = vmatpush.msra.mxu0 0.0
        %1022 = vmatpush.msra.mxu0 0.0
        %1023 = vmatpush.msra.mxu0 0.0
        %1024 = vmatpush.msra.mxu0 0.0
        %1025 = vmatpush.msra.mxu0 %v1000
        %1026 = vmatmul.f32.gmra.mxu0 %v1008
        %v1027 = vpop.f32.mrf.mxu0
        %v1028 = vadd.f32 %v1005, %v1027
        %1029 = vdwg.mxu0
        %v1030 = vadd.f32 %v409, %v1028
        %v1031 = vmul.f32 %v1030, %v927
        %1032 = vst [vmem:[%s400] sm:$0xff] %v1031
        %s1033 = sand.u32 %s253, 1
        %s1034 = scalar_lea.sflag [#allocation4], %s1033
        %s1035 = sand.u32 %s253, 1
        %s1036 = smul.addr %s1035, 8
        %s1037 = scalar_lea.vmem [#allocation7], %s1036
        // Predicated region
        $region65: #{tpu_custom_call.1} parent=55 // pred_check
          %p1038 = pneg %p263
        $region66: #{tpu_custom_call.1} parent=55 // pred_check_branch
          %1040 = sbr.rel (%p1038) target = $region68
        $region67: #{tpu_custom_call.1} parent=55 // pred_region
          %1042 = vsyncadd %s1034, 0
          %s1043 = sadd.s32 %s32, %s31
          %s1044 = smul.addr %s1043, 8
          %s1045 = scalar_lea.hbm %s9, %s1044
          %s1047 = sshll.u32 %s1037, 4
          %s1048 = int_to_ptr.vmem [resolvable:$true] %s1047
          %s1049 = sshll.u32 %s1045, 4
          %s1050 = int_to_ptr.hbm [resolvable:$true] %s1049
          %1052 = dma.vmem_to_hbm [thread:$0]  %s1048, 128, %s1050, %s1034
        $region68: #{tpu_custom_call.1} parent=55 // pred_fallthru
          _
      $region56: #{tpu_custom_call.1} parent=5 // pred_fallthru
        _
      %p1053 = scmp.le.s32.totalorder 2, %s22
      // Predicated region
      $region69: #{tpu_custom_call.1} parent=5 // pred_check
        %p1054 = pneg %p1053
      $region70: #{tpu_custom_call.1} parent=5 // pred_check_branch
        %1056 = sbr.rel (%p1054) target = $region72
      $region71: #{tpu_custom_call.1} parent=5 // pred_region
        %s1057 = ssub.s32 %s22, 2
        // Predicated region
        $region73: #{tpu_custom_call.1} parent=71 // pred_check
          %p1058 = pneg %p269
        $region74: #{tpu_custom_call.1} parent=71 // pred_check_branch
          %1060 = sbr.rel (%p1058) target = $region76
        $region75: #{tpu_custom_call.1} parent=71 // pred_region
          %s1061 = sand.u32 %s254, 1
          %s1062 = scalar_lea.sflag [#allocation4], %s1061
          %s1063 = sand.u32 %s254, 1
          %s1064 = smul.addr %s1063, 8
          %s1065 = scalar_lea.vmem [#allocation7], %s1064
          %1067 = dma.done %s1062, 128
        $region76: #{tpu_custom_call.1} parent=71 // pred_fallthru
          _
      $region72: #{tpu_custom_call.1} parent=5 // pred_fallthru
        _
    $region6: #{tpu_custom_call.1} parent=1 // loop_footer
      %s26 = sadd.s32 1, %s22
    $region7: #{tpu_custom_call.1} parent=1 // loop_footer_branch
      %21 = sbr.rel target = $region3
    $region8: #{tpu_custom_call.1} parent=1 // loop_exit
      _
    %1068 = vsyncpa [#allocation3], 1
    %s1069 = scalar_lea.sflag [#allocation3], 1
    %1070 = vsyncpa %s1069, 1
    %1071 = vsyncpa [#allocation6], 1
    %1072 = vsyncpa [#allocation4], 1
    %s1073 = scalar_lea.sflag [#allocation4], 1
    %1074 = vsyncpa %s1073, 1

</llo_original>
